<compile_context>
chip_gen: v5e
topology: v5e:2x2
jax: 0.10.0
libtpu: 0.0.40
codegen_flags: <defaults>
</compile_context>

<pallas_src>
import functools

import jax
import jax.numpy as jnp
from jax import lax
from jax.experimental import pallas as pl
from jax.experimental.pallas import tpu as pltpu


def _round_up(x, m):
    return ((x + m - 1) // m) * m


def _num_tensorcores():
    """Best-effort TensorCore count per chip (2 on v7x, 1 on v5e/v6e)."""
    try:
        info = pltpu.get_tpu_info()
        for attr in ("num_cores", "tensorcores_per_chip", "num_tensorcores",
                     "cores_per_chip"):
            v = getattr(info, attr, None)
            if v:
                return max(1, int(v))
    except Exception:
        pass
    try:
        kind = jax.devices()[0].device_kind.lower()
        if "v7" in kind:
            return 2
    except Exception:
        pass
    return 1


def _physical_vmem_bytes():
    """Physical VMEM per core; conservative 64 MiB fallback (v7x)."""
    try:
        info = pltpu.get_tpu_info()
        v = getattr(info, "vmem_capacity_bytes", None)
        if v:
            return int(v)
    except Exception:
        pass
    return 64 << 20


def _vae_loss_kernel(x_ref, y_ref, mean_ref, std_ref, mse_part_ref, kld_ref,
                     acc_ref, *, eps, n_z, rows, tile_rows, inner,
                     mask_from_chunk):
    p = pl.program_id(0)   # parallel axis (one partial per TensorCore)
    i = pl.program_id(1)   # reduction axis over row tiles

    # Init the (8, 128) accumulator at the start of each core's chunk range.
    @pl.when(i == 0)
    def _():
        acc_ref[...] = jnp.zeros_like(acc_ref)

    # Squared difference for this tile (upcast in-register; inputs stay native).
    d = x_ref[...].astype(jnp.float32) - y_ref[...].astype(jnp.float32)
    sq = d * d

    def _accumulate(vals):
        # (tile_rows, 128) -> (tile_rows//8, 8, 128) -> sum over leading dim:
        # pure VALU vreg adds, no per-step XLU sublane reduce.
        acc_ref[...] += jnp.sum(
            vals.reshape(tile_rows // 8, 8, vals.shape[-1]), axis=0)

    if mask_from_chunk is None:
        # No overhang / no partial last tile: fast path, no iota, no select.
        _accumulate(sq)
    else:
        chunk = p * inner + i          # logical chunk index, UNclamped

        @pl.when(chunk < mask_from_chunk)
        def _():
            _accumulate(sq)

        @pl.when(chunk >= mask_from_chunk)
        def _():
            # Partial or overhang chunk: mask invalid rows (select, not mul).
            row0 = chunk * tile_rows
            local_row = lax.broadcasted_iota(jnp.int32, sq.shape, 0)
            _accumulate(jnp.where(row0 + local_row < rows, sq, 0.0))

    # Finalize: one cross-sublane+lane reduce to this core's partial + tiny KLD.
    @pl.when(i == pl.num_programs(1) - 1)
    def _():
        mse_part_ref[...] = jnp.sum(acc_ref[...]).reshape(1, 1, 1)

        m = mean_ref[...].astype(jnp.float32)
        s = std_ref[...].astype(jnp.float32)
        var = s * s
        kterm = 1.0 + jnp.log(var + eps) - m * m - var
        kld_ref[...] = ((-0.5) * jnp.sum(kterm) / n_z).reshape(1, 1, 1)


def vae_loss(x, y, mean, std, *, weight_mse=100.0, eps=1e-10,
             tile_rows=8192, num_cores=None):
    """Returns (mse, kld) scalars matching VAELoss.forward."""
    lanes = 128
    n_xy = x.size
    n_z = mean.size
    itemsize = int(jnp.dtype(x.dtype).itemsize)
    sub_mult = max(8, 32 // max(1, itemsize))   # 8 f32, 16 bf16, 32 int8/fp8

    xf = x.reshape(-1)
    yf = y.reshape(-1)
    rows = n_xy // lanes
    tail_sum = jnp.float32(0.0)

    if rows == 0:
        # Tiny input (< 128 elems): pad to one native tile (zeros add 0 to sum).
        tot = sub_mult * lanes
        xf = jnp.pad(xf, (0, tot - n_xy))
        yf = jnp.pad(yf, (0, tot - n_xy))
        rows = sub_mult
        x2 = xf.reshape(rows, lanes)
        y2 = yf.reshape(rows, lanes)
    elif rows * lanes == n_xy:
        # Lane-divisible: free reshape of contiguous data, NO pad, NO copy.
        x2 = xf.reshape(rows, lanes)
        y2 = yf.reshape(rows, lanes)
    else:
        # Non-divisible: kernel consumes the lane-divisible prefix; the
        # < 128-element tail is folded in with plain JAX (no full-array pad).
        n_main = rows * lanes
        x2 = xf[:n_main].reshape(rows, lanes)
        y2 = yf[:n_main].reshape(rows, lanes)
        dt = xf[n_main:].astype(jnp.float32) - yf[n_main:].astype(jnp.float32)
        tail_sum = jnp.sum(dt * dt)

    m2 = mean.reshape(mean.shape[0], -1) if mean.ndim >= 2 else mean.reshape(1, -1)
    s2 = std.reshape(std.shape[0], -1) if std.ndim >= 2 else std.reshape(1, -1)

    # Large lane-dense tiles, rounded to the packed-sublane multiple and capped
    # to the input size.
    tile_rows = max(sub_mult, min(int(tile_rows), _round_up(rows, sub_mult)))
    tile_rows = _round_up(tile_rows, sub_mult)

    # Cap the VMEM budget to this generation's physical VMEM minus headroom
    # (64 MiB on v7x, 128 MiB on v5e/v6e); shrink tile_rows if it doesn't fit.
    phys_vmem = _physical_vmem_bytes()
    cap = max(32 << 20, phys_vmem - (16 << 20))
    while True:
        tile_bytes = tile_rows * lanes * itemsize
        budget = 4 * tile_bytes + (8 << 20)   # 2 inputs x 2 buffers + headroom
        if budget <= cap or tile_rows <= sub_mult:
            break
        tile_rows = max(sub_mult, _round_up(tile_rows // 2, sub_mult))
    vmem_limit = int(min(max(budget, 32 << 20), cap))

    num_blocks = pl.cdiv(rows, tile_rows)
    n_par = _num_tensorcores() if num_cores is None else int(num_cores)
    n_par = max(1, min(n_par, num_blocks))     # 1 on v5e/v6e, up to 2 on v7x
    inner = pl.cdiv(num_blocks, n_par)

    # Masking is only needed if the last real block is partial or the grid has
    # overhang chunks (at most n_par - 1 of them).
    has_overhang = (rows % tile_rows != 0) or (n_par * inner != num_blocks)
    mask_from_chunk = (rows // tile_rows) if has_overhang else None

    def xy_map(p, i):
        # Clamp to a valid block; overhang grid points are fully masked in-kernel.
        return (jnp.minimum(p * inner + i, num_blocks - 1), 0)

    kernel = functools.partial(
        _vae_loss_kernel,
        eps=float(eps),
        n_z=float(n_z),
        rows=int(rows),
        tile_rows=int(tile_rows),
        inner=int(inner),
        mask_from_chunk=mask_from_chunk,
    )

    mse_parts, kld_parts = pl.pallas_call(
        kernel,
        out_shape=(
            jax.ShapeDtypeStruct((n_par, 1, 1), jnp.float32),
            jax.ShapeDtypeStruct((n_par, 1, 1), jnp.float32),
        ),
        grid_spec=pltpu.PrefetchScalarGridSpec(
            num_scalar_prefetch=0,
            grid=(n_par, inner),
            in_specs=[
                pl.BlockSpec((tile_rows, lanes), xy_map),        # x tile
                pl.BlockSpec((tile_rows, lanes), xy_map),        # y tile
                pl.BlockSpec(m2.shape, lambda p, i: (0, 0)),     # mean (full, fetched once)
                pl.BlockSpec(s2.shape, lambda p, i: (0, 0)),     # std  (full, fetched once)
            ],
            out_specs=[
                pl.BlockSpec((1, 1, 1), lambda p, i: (p, 0, 0)),  # per-core mse partial
                pl.BlockSpec((1, 1, 1), lambda p, i: (p, 0, 0)),  # kld (same per core)
            ],
            scratch_shapes=[pltpu.VMEM((8, lanes), jnp.float32)],  # (8,128) accumulator
        ),
        compiler_params=pltpu.CompilerParams(
            dimension_semantics=("parallel", "arbitrary"),
            vmem_limit_bytes=vmem_limit,
        ),
    )(x2, y2, m2, s2)

    # Tiny cross-core combine + JAX tail fold-in in the wrapper.
    mse = (weight_mse / n_xy) * (jnp.sum(mse_parts) + tail_sum)
    kld = kld_parts[0, 0, 0]
    return mse, kld


def vae_loss_reference(x, y, mean, std, *, weight_mse=100.0, eps=1e-10):
    mse = weight_mse * jnp.mean((x - y) ** 2)
    kld = -0.5 * jnp.mean(1.0 + jnp.log(std ** 2 + eps) - mean ** 2 - std ** 2)
    return mse, kld


if __name__ == "__main__":
    key = jax.random.PRNGKey(0)
    kx, ky, km, ks = jax.random.split(key, 4)

    # Small shapes consistent with a VAE: images (B,C,H,W), latent (B, Z).
    x = jax.random.normal(kx, (2, 4, 16, 16), dtype=jnp.float32)
    y = jax.random.normal(ky, (2, 4, 16, 16), dtype=jnp.float32)
    mean = jax.random.normal(km, (2, 32), dtype=jnp.float32)
    std = jnp.abs(jax.random.normal(ks, (2, 32), dtype=jnp.float32)) + 0.5

    mse, kld = vae_loss(x, y, mean, std)
    jax.block_until_ready((mse, kld))

    mse_ref, kld_ref = vae_loss_reference(x, y, mean, std)
    assert jnp.allclose(mse, mse_ref, rtol=1e-5, atol=1e-5), (mse, mse_ref)
    assert jnp.allclose(kld, kld_ref, rtol=1e-5, atol=1e-5), (kld, kld_ref)

    print("KERNEL_OK")
</pallas_src>

<mosaic_0001>
module attributes {stable_mosaic.version = 11 : i64} {
  func.func @_vae_loss_kernel(%arg0: i32, %arg1: i32, %arg2: memref<16x128xf32, #tpu.memory_space<vmem>>, %arg3: memref<16x128xf32, #tpu.memory_space<vmem>>, %arg4: memref<2x32xf32, #tpu.memory_space<vmem>>, %arg5: memref<2x32xf32, #tpu.memory_space<vmem>>, %arg6: memref<1x1x1xf32, #tpu.memory_space<vmem>>, %arg7: memref<1x1x1xf32, #tpu.memory_space<vmem>>, %arg8: memref<8x128xf32, #tpu.memory_space<vmem>>) attributes {dimension_semantics = [#tpu.dimension_semantics<parallel>, #tpu.dimension_semantics<arbitrary>], iteration_bounds = array<i64: 1, 1>, scalar_prefetch = 0 : i64, scratch_operands = 1 : i64, tpu.core_type = #tpu.core_type<tc>, window_params = [{transform_indices = @transform_0, window_bounds = array<i64: 16, 128>}, {transform_indices = @transform_1, window_bounds = array<i64: 16, 128>}, {pipeline_mode = #tpu.pipeline_mode<synchronous>, transform_indices = @transform_2, window_bounds = array<i64: 2, 32>}, {pipeline_mode = #tpu.pipeline_mode<synchronous>, transform_indices = @transform_3, window_bounds = array<i64: 2, 32>}, {transform_indices = @transform_4, window_bounds = array<i64: 1, 1, 1>}, {transform_indices = @transform_5, window_bounds = array<i64: 1, 1, 1>}]} {
    %c0_i32 = arith.constant 0 : i32
    %0 = arith.cmpi eq, %arg1, %c0_i32 : i32
    %1 = arith.extui %0 : i1 to i32
    %c0_i32_0 = arith.constant 0 : i32
    %2 = arith.cmpi ne, %1, %c0_i32_0 : i32
    scf.if %2 {
      %cst_10 = arith.constant 0.000000e+00 : f32
      %15 = vector.broadcast %cst_10 : f32 to vector<8x128xf32>
      %c0_11 = arith.constant 0 : index
      %c0_12 = arith.constant 0 : index
      %16 = vector.load %arg8[%c0_11, %c0_12] : memref<8x128xf32, #tpu.memory_space<vmem>>, vector<8x128xf32>
      tpu.vector_store %arg8[%c0_11, %c0_12], %15 {strides = array<i32>} : memref<8x128xf32, #tpu.memory_space<vmem>>, vector<8x128xf32>,
    } else {
    }
    %c0 = arith.constant 0 : index
    %c0_1 = arith.constant 0 : index
    %3 = vector.load %arg2[%c0, %c0_1] : memref<16x128xf32, #tpu.memory_space<vmem>>, vector<16x128xf32>
    %c0_2 = arith.constant 0 : index
    %c0_3 = arith.constant 0 : index
    %4 = vector.load %arg3[%c0_2, %c0_3] : memref<16x128xf32, #tpu.memory_space<vmem>>, vector<16x128xf32>
    %5 = arith.subf %3, %4 : vector<16x128xf32>
    %6 = arith.mulf %5, %5 : vector<16x128xf32>
    %c0_4 = arith.constant 0 : index
    %c0_5 = arith.constant 0 : index
    %7 = vector.load %arg8[%c0_4, %c0_5] : memref<8x128xf32, #tpu.memory_space<vmem>>, vector<8x128xf32>
    %8 = vector.shape_cast %6 : vector<16x128xf32> to vector<2x8x128xf32>
    %cst = arith.constant dense<0.000000e+00> : vector<8x128xf32>
    %9 = vector.multi_reduction <add>, %8, %cst [0] : vector<2x8x128xf32> to vector<8x128xf32>
    %10 = arith.addf %7, %9 : vector<8x128xf32>
    %c0_6 = arith.constant 0 : index
    %c0_7 = arith.constant 0 : index
    %11 = vector.load %arg8[%c0_6, %c0_7] : memref<8x128xf32, #tpu.memory_space<vmem>>, vector<8x128xf32>
    tpu.vector_store %arg8[%c0_6, %c0_7], %10 {strides = array<i32>} : memref<8x128xf32, #tpu.memory_space<vmem>>, vector<8x128xf32>,
    %c0_i32_8 = arith.constant 0 : i32
    %12 = arith.cmpi eq, %arg1, %c0_i32_8 : i32
    %13 = arith.extui %12 : i1 to i32
    %c0_i32_9 = arith.constant 0 : i32
    %14 = arith.cmpi ne, %13, %c0_i32_9 : i32
    scf.if %14 {
      %c0_10 = arith.constant 0 : index
      %c0_11 = arith.constant 0 : index
      %15 = vector.load %arg8[%c0_10, %c0_11] : memref<8x128xf32, #tpu.memory_space<vmem>>, vector<8x128xf32>
      %16 = vector.shape_cast %15 : vector<8x128xf32> to vector<1x8x128xf32>
      %cst_12 = arith.constant dense<0.000000e+00> : vector<1xf32>
      %17 = vector.multi_reduction <add>, %16, %cst_12 [1, 2] : vector<1x8x128xf32> to vector<1xf32>
      %18 = vector.shape_cast %17 : vector<1xf32> to vector<1x1x1xf32>
      %19 = vector.extract %18[0, 0, 0] : f32 from vector<1x1x1xf32>
      %20 = vector.broadcast %19 : f32 to vector<1x1x1xf32>
      %c0_13 = arith.constant 0 : index
      %c0_14 = arith.constant 0 : index
      %c0_15 = arith.constant 0 : index
      %21 = vector.load %arg6[%c0_13, %c0_14, %c0_15] : memref<1x1x1xf32, #tpu.memory_space<vmem>>, vector<1x1x1xf32>
      tpu.vector_store %arg6[%c0_13, %c0_14, %c0_15], %20 {strides = array<i32>} : memref<1x1x1xf32, #tpu.memory_space<vmem>>, vector<1x1x1xf32>,
      %c0_16 = arith.constant 0 : index
      %c0_17 = arith.constant 0 : index
      %22 = vector.load %arg4[%c0_16, %c0_17] : memref<2x32xf32, #tpu.memory_space<vmem>>, vector<2x32xf32>
      %c0_18 = arith.constant 0 : index
      %c0_19 = arith.constant 0 : index
      %23 = vector.load %arg5[%c0_18, %c0_19] : memref<2x32xf32, #tpu.memory_space<vmem>>, vector<2x32xf32>
      %24 = arith.mulf %23, %23 : vector<2x32xf32>
      %cst_20 = arith.constant 1.000000e-10 : f32
      %25 = vector.broadcast %cst_20 : f32 to vector<2x32xf32>
      %26 = arith.addf %24, %25 : vector<2x32xf32>
      %27 = math.log %26 : vector<2x32xf32>
      %cst_21 = arith.constant 1.000000e+00 : f32
      %28 = vector.broadcast %cst_21 : f32 to vector<2x32xf32>
      %29 = arith.addf %28, %27 : vector<2x32xf32>
      %30 = arith.mulf %22, %22 : vector<2x32xf32>
      %31 = arith.subf %29, %30 : vector<2x32xf32>
      %32 = arith.subf %31, %24 : vector<2x32xf32>
      %33 = vector.shape_cast %32 : vector<2x32xf32> to vector<1x2x32xf32>
      %cst_22 = arith.constant dense<0.000000e+00> : vector<1xf32>
      %34 = vector.multi_reduction <add>, %33, %cst_22 [1, 2] : vector<1x2x32xf32> to vector<1xf32>
      %35 = vector.shape_cast %34 : vector<1xf32> to vector<1x1x1xf32>
      %36 = vector.extract %35[0, 0, 0] : f32 from vector<1x1x1xf32>
      %cst_23 = arith.constant -5.000000e-01 : f32
      %37 = arith.mulf %cst_23, %36 : f32
      %cst_24 = arith.constant 6.400000e+01 : f32
      %38 = arith.divf %37, %cst_24 : f32
      %39 = vector.broadcast %38 : f32 to vector<1x1x1xf32>
      %c0_25 = arith.constant 0 : index
      %c0_26 = arith.constant 0 : index
      %c0_27 = arith.constant 0 : index
      %40 = vector.load %arg7[%c0_25, %c0_26, %c0_27] : memref<1x1x1xf32, #tpu.memory_space<vmem>>, vector<1x1x1xf32>
      tpu.vector_store %arg7[%c0_25, %c0_26, %c0_27], %39 {strides = array<i32>} : memref<1x1x1xf32, #tpu.memory_space<vmem>>, vector<1x1x1xf32>,
    } else {
    }
    return
  }
  func.func @transform_0(%arg0: i32, %arg1: i32) -> (i32, i32) {
    %c1_i32 = arith.constant 1 : i32
    %0 = arith.muli %arg0, %c1_i32 : i32
    %1 = arith.addi %0, %arg1 : i32
    %c0_i32 = arith.constant 0 : i32
    %2 = arith.minsi %1, %c0_i32 : i32
    %c0_i32_0 = arith.constant 0 : i32
    %c0_i32_1 = arith.constant 0 : i32
    return %2, %c0_i32_0 : i32, i32
  }
  func.func @transform_1(%arg0: i32, %arg1: i32) -> (i32, i32) {
    %c1_i32 = arith.constant 1 : i32
    %0 = arith.muli %arg0, %c1_i32 : i32
    %1 = arith.addi %0, %arg1 : i32
    %c0_i32 = arith.constant 0 : i32
    %2 = arith.minsi %1, %c0_i32 : i32
    %c0_i32_0 = arith.constant 0 : i32
    %c0_i32_1 = arith.constant 0 : i32
    return %2, %c0_i32_0 : i32, i32
  }
  func.func @transform_2(%arg0: i32, %arg1: i32) -> (i32, i32) {
    %c0_i32 = arith.constant 0 : i32
    %c0_i32_0 = arith.constant 0 : i32
    %c0_i32_1 = arith.constant 0 : i32
    return %c0_i32, %c0_i32_0 : i32, i32
  }
  func.func @transform_3(%arg0: i32, %arg1: i32) -> (i32, i32) {
    %c0_i32 = arith.constant 0 : i32
    %c0_i32_0 = arith.constant 0 : i32
    %c0_i32_1 = arith.constant 0 : i32
    return %c0_i32, %c0_i32_0 : i32, i32
  }
  func.func @transform_4(%arg0: i32, %arg1: i32) -> (i32, i32, i32) {
    %c0_i32 = arith.constant 0 : i32
    %c0_i32_0 = arith.constant 0 : i32
    %c0_i32_1 = arith.constant 0 : i32
    return %arg0, %c0_i32, %c0_i32_0 : i32, i32, i32
  }
  func.func @transform_5(%arg0: i32, %arg1: i32) -> (i32, i32, i32) {
    %c0_i32 = arith.constant 0 : i32
    %c0_i32_0 = arith.constant 0 : i32
    %c0_i32_1 = arith.constant 0 : i32
    return %arg0, %c0_i32, %c0_i32_0 : i32, i32, i32
  }
}

</mosaic_0001>

<llo_original>
// kernel: tpu_custom_call.1
$region0: #{tpu_custom_call.1}
  #allocation0 [shape = 'u32[]', space=smem, size = 0x4, offset = 0x4, fixed_abs, tag = 'smem constant byte address 0x4 - core index']
  #allocation1 [shape = 'u32[72,128]{1,0:T(1,128)}', space=vmem, size = 0x9000, scoped, tag = 'internal scratch']
  #allocation2 [shape = 'f32[8,128]{1,0:T(8,128)}', space=vmem, size = 0x1000, scoped, tag = 'scratch operand']
  %s0 = inlined_call_operand.hbm [shape: f32[16,128], index: 0, kind: input, shape index: {}]
  %s1 = inlined_call_operand.hbm [shape: f32[16,128], index: 1, kind: input, shape index: {}]
  %s2 = inlined_call_operand.hbm [shape: f32[2,32], index: 2, kind: input, shape index: {}]
  %s3 = inlined_call_operand.vmem [shape: f32[2,32], index: 3, kind: input, shape index: {}]
  %s4 = inlined_call_operand.hbm [shape: f32[1,1,1], index: 4, kind: output, shape index: {0}]
  %s5 = inlined_call_operand.hbm [shape: f32[1,1,1], index: 5, kind: output, shape index: {1}]
  %6 = xla_tuple %s4, %s5
  %s7 = sld [smem:[#allocation0]]
  $region54: #{tpu_custom_call.1} parent=0
    _
  %s9 = ssub.s32 1, %s7
  %s10 = scalar_select 0, %s9, %s7
  $region1: #{tpu_custom_call.1} parent=0
    #allocation3 [shape = 'u8[8192]{0}', space=vmem, size = 0x2000, scoped, tag = 'input window, operand 0, single buffered']
    #allocation4 [shape = 's32[1]{0}', space=sflag, size = 0x4, scoped, tag = 'scoped memory for tpu_custom_call.1']
    #allocation5 [shape = 's32[1]{0}', space=sflag, size = 0x4, scoped, tag = 'scoped memory for tpu_custom_call.1']
    #allocation6 [shape = 'u8[8192]{0}', space=vmem, size = 0x2000, scoped, tag = 'input window, operand 1, single buffered']
    #allocation7 [shape = 's32[1]{0}', space=sflag, size = 0x4, scoped, tag = 'scoped memory for tpu_custom_call.1']
    #allocation8 [shape = 'u8[1024]{0}', space=vmem, size = 0x400, scoped, tag = 'input window, operand 2, single buffered']
    #allocation9 [shape = 'u8[512]{0}', space=vmem, size = 0x400, scoped, tag = 'output window, operand 0, single buffered']
    #allocation10 [shape = 'u8[512]{0}', space=vmem, size = 0x400, scoped, tag = 'output window, operand 1, single buffered']
    #allocation11 [shape = 's32[1]{0}', space=sflag, size = 0x4, scoped, tag = 'scoped memory for tpu_custom_call.1']
    %11 = vsyncpa [#allocation4], 0
    %12 = vsyncpa [#allocation7], 0
    %13 = vsyncpa [#allocation5], 0
    %14 = vsyncpa [#allocation11], 0
    // Predicated region
    $region2: #{tpu_custom_call.1} parent=1 // pred_check
      _
    $region3: #{tpu_custom_call.1} parent=1 // pred_check_branch
      %16 = sbr.rel (0) target = $region5
    $region4: #{tpu_custom_call.1} parent=1 // pred_region
      %s17 = sadd.s32 0, 0
      %p18 = scmp.lt.s32.totalorder %s17, 0
      %s19 = scalar_select %p18, %s17, 0
      %s20 = smul.u32 2, %s19
      %22 = vsyncadd [#allocation4], 0
      %s23 = smul.addr %s20, 8
      %s24 = scalar_lea.hbm %s0, %s23
      %s25 = sshll.u32 %s24, 4
      %s26 = int_to_ptr.hbm [resolvable:$true] %s25
      %s27 = sshll.u32 [#allocation3], 4
      %s28 = int_to_ptr.vmem [resolvable:$true] %s27
      %33 = dma.hbm_to_vmem [thread:$0]  %s26, 256, %s28, [#allocation4], 128, 128, 8
    $region5: #{tpu_custom_call.1} parent=1 // pred_fallthru
      _
    // Predicated region
    $region6: #{tpu_custom_call.1} parent=1 // pred_check
      _
    $region7: #{tpu_custom_call.1} parent=1 // pred_check_branch
      %35 = sbr.rel (0) target = $region9
    $region8: #{tpu_custom_call.1} parent=1 // pred_region
      %s36 = sadd.s32 0, 0
      %p37 = scmp.lt.s32.totalorder %s36, 0
      %s38 = scalar_select %p37, %s36, 0
      %s39 = smul.u32 2, %s38
      %41 = vsyncadd [#allocation7], 0
      %s42 = smul.addr %s39, 8
      %s43 = scalar_lea.hbm %s1, %s42
      %s44 = sshll.u32 %s43, 4
      %s45 = int_to_ptr.hbm [resolvable:$true] %s44
      %s46 = sshll.u32 [#allocation6], 4
      %s47 = int_to_ptr.vmem [resolvable:$true] %s46
      %52 = dma.hbm_to_vmem [thread:$0]  %s45, 256, %s47, [#allocation7], 128, 128, 8
    $region9: #{tpu_custom_call.1} parent=1 // pred_fallthru
      _
    // Predicated region
    $region10: #{tpu_custom_call.1} parent=1 // pred_check
      _
    $region11: #{tpu_custom_call.1} parent=1 // pred_check_branch
      %54 = sbr.rel (0) target = $region13
    $region12: #{tpu_custom_call.1} parent=1 // pred_region
      %56 = vsyncadd [#allocation7], 0
      %s58 = sshll.u32 %s2, 4
      %s59 = int_to_ptr.hbm [resolvable:$true] %s58
      %s60 = sshll.u32 [#allocation8], 4
      %s61 = int_to_ptr.vmem [resolvable:$true] %s60
      %63 = dma.hbm_to_vmem [thread:$0]  %s59, 32, %s61, [#allocation7]
    $region13: #{tpu_custom_call.1} parent=1 // pred_fallthru
      _
    // Predicated region
    $region14: #{tpu_custom_call.1} parent=1 // pred_check
      _
    $region15: #{tpu_custom_call.1} parent=1 // pred_check_branch
      %65 = sbr.rel (0) target = $region17
    $region16: #{tpu_custom_call.1} parent=1 // pred_region
      _
    $region17: #{tpu_custom_call.1} parent=1 // pred_fallthru
      _
    // Predicated region
    $region18: #{tpu_custom_call.1} parent=1 // pred_check
      _
    $region19: #{tpu_custom_call.1} parent=1 // pred_check_branch
      %67 = sbr.rel (0) target = $region21
    $region20: #{tpu_custom_call.1} parent=1 // pred_region
      %69 = dma.done [#allocation4], 256
    $region21: #{tpu_custom_call.1} parent=1 // pred_fallthru
      _
    // Predicated region
    $region22: #{tpu_custom_call.1} parent=1 // pred_check
      _
    $region23: #{tpu_custom_call.1} parent=1 // pred_check_branch
      %71 = sbr.rel (0) target = $region25
    $region24: #{tpu_custom_call.1} parent=1 // pred_region
      %73 = dma.done [#allocation7], 256
    $region25: #{tpu_custom_call.1} parent=1 // pred_fallthru
      _
    // Predicated region
    $region26: #{tpu_custom_call.1} parent=1 // pred_check
      _
    $region27: #{tpu_custom_call.1} parent=1 // pred_check_branch
      %75 = sbr.rel (0) target = $region29
    $region28: #{tpu_custom_call.1} parent=1 // pred_region
      %77 = dma.done [#allocation7], 32
    $region29: #{tpu_custom_call.1} parent=1 // pred_fallthru
      _
    %s78 = sadd.s32 0, 0
    %p79 = scmp.lt.s32.totalorder %s78, 0
    %s80 = scalar_select %p79, %s78, 0
    %s81 = smul.u32 2, %s80
    %s82 = sadd.s32 0, 0
    %p83 = scmp.lt.s32.totalorder %s82, 0
    %s84 = scalar_select %p83, %s82, 0
    %s85 = smul.u32 2, %s84
    %p86 = scmp.eq.s32.totalorder 0, 0
    // Predicated region
    $region30: #{tpu_custom_call.1} parent=1 // pred_check
      %p87 = pneg %p86
    $region31: #{tpu_custom_call.1} parent=1 // pred_check_branch
      %89 = sbr.rel (%p87) target = $region33
    $region32: #{tpu_custom_call.1} parent=1 // pred_region
      %90 = vst [vmem:[#allocation2] sm:$0xff] 0.0
    $region33: #{tpu_custom_call.1} parent=1 // pred_fallthru
      _
    %v91 = vld [vmem:[#allocation3] sm:$0xff]
    %v92 = vld [vmem:[#allocation3 + $0x8] sm:$0xff]
    %v93 = vld [vmem:[#allocation6] sm:$0xff]
    %v94 = vld [vmem:[#allocation6 + $0x8] sm:$0xff]
    %v95 = vsub.f32 %v91, %v93
    %v96 = vsub.f32 %v92, %v94
    %v97 = vmul.f32 %v95, %v95
    %v98 = vmul.f32 %v96, %v96
    %v99 = vld [vmem:[#allocation2] sm:$0xff]
    %v100 = vadd.f32 %v97, %v98
    %v101 = vadd.f32 %v99, %v100
    %102 = vst [vmem:[#allocation2] sm:$0xff] %v101
    // Predicated region
    $region34: #{tpu_custom_call.1} parent=1 // pred_check
      %p103 = pneg %p86
    $region35: #{tpu_custom_call.1} parent=1 // pred_check_branch
      %105 = sbr.rel (%p103) target = $region37
    $region36: #{tpu_custom_call.1} parent=1 // pred_region
      %v106 = vld [vmem:[#allocation2] sm:$0xff]
      %107 = vadd.xlane.f32.xlu0 %v106
      %v108 = vpop.xlane.xlu0 %107
      %v109 = vrot.slane %v108, 4
      %v110 = vadd.f32 %v108, %v109
      %v111 = vrot.slane %v110, 2
      %v112 = vadd.f32 %v110, %v111
      %v113 = vrot.slane %v112, 1
      %v114 = vadd.f32 %v112, %v113
      %s115 = vtos %v114
      %v116 = vstv %s115
      %vm117 = vcmask 0
      %118 = vst.msk [vmem:[#allocation9] sm:$0x1] %vm117, %v116
      %v119 = vld [vmem:[#allocation8] sm:$0x3]
      %v120 = vld [vmem:[%s3] sm:$0x3]
      %v121 = vmul.f32 %v120, %v120
      %v122 = vadd.f32 %v121, 1e-10
      %v123 = vlog2.pop %v122
      %v124 = vmul.f32 %v123, 0.6931472
      %v125 = vadd.f32 %v124, 1.0
      %v126 = vmul.f32 %v119, %v119
      %v127 = vsub.f32 %v125, %v126
      %v128 = vsub.f32 %v127, %v121
      %vm129 = vcmask 254976
      %v130 = vsel %vm129, %v128, 0.0
      %131 = vadd.xlane.f32.xlu0 %v130
      %v132 = vpop.xlane.xlu0 %131
      %v133 = vrot.slane %v132, 4
      %v134 = vadd.f32 %v132, %v133
      %v135 = vrot.slane %v134, 2
      %v136 = vadd.f32 %v134, %v135
      %v137 = vrot.slane %v136, 1
      %v138 = vadd.f32 %v136, %v137
      %s139 = vtos %v138
      %s140 = smul.f32 %s139, -0.5
      %v141 = vrcp.pop 64.0
      %v142 = vmul.f32 64.0, %v141
      %v143 = vsub.f32 1.0, %v142
      %v144 = vmul.f32 %v141, %v143
      %v145 = vadd.f32 %v141, %v144
      %vm146 = vweird.f32 %v141
      %v147 = vsel %vm146, %v141, %v145
      %s148 = vtos %v147
      %s149 = smul.f32 %s140, %s148
      %v150 = vstv %s149
      %151 = vst.msk [vmem:[#allocation10] sm:$0x1] %vm117, %v150
    $region37: #{tpu_custom_call.1} parent=1 // pred_fallthru
      _
    // Predicated region
    $region38: #{tpu_custom_call.1} parent=1 // pred_check
      _
    $region39: #{tpu_custom_call.1} parent=1 // pred_check_branch
      %153 = sbr.rel (0) target = $region41
    $region40: #{tpu_custom_call.1} parent=1 // pred_region
      %155 = vsyncadd [#allocation5], 0
      %s157 = sshll.u32 [#allocation9], 4
      %s158 = int_to_ptr.vmem [resolvable:$true] %s157
      %s159 = sshll.u32 %s4, 4
      %s160 = int_to_ptr.hbm [resolvable:$true] %s159
      %162 = dma.vmem_to_hbm [thread:$0]  %s158, 16, %s160, [#allocation5]
    $region41: #{tpu_custom_call.1} parent=1 // pred_fallthru
      _
    // Predicated region
    $region42: #{tpu_custom_call.1} parent=1 // pred_check
      _
    $region43: #{tpu_custom_call.1} parent=1 // pred_check_branch
      %164 = sbr.rel (0) target = $region45
    $region44: #{tpu_custom_call.1} parent=1 // pred_region
      %166 = vsyncadd [#allocation11], 0
      %s168 = sshll.u32 [#allocation10], 4
      %s169 = int_to_ptr.vmem [resolvable:$true] %s168
      %s170 = sshll.u32 %s5, 4
      %s171 = int_to_ptr.hbm [resolvable:$true] %s170
      %173 = dma.vmem_to_hbm [thread:$0]  %s169, 16, %s171, [#allocation11]
    $region45: #{tpu_custom_call.1} parent=1 // pred_fallthru
      _
    // Predicated region
    $region46: #{tpu_custom_call.1} parent=1 // pred_check
      _
    $region47: #{tpu_custom_call.1} parent=1 // pred_check_branch
      %175 = sbr.rel (0) target = $region49
    $region48: #{tpu_custom_call.1} parent=1 // pred_region
      %177 = dma.done [#allocation5], 16
    $region49: #{tpu_custom_call.1} parent=1 // pred_fallthru
      _
    // Predicated region
    $region50: #{tpu_custom_call.1} parent=1 // pred_check
      _
    $region51: #{tpu_custom_call.1} parent=1 // pred_check_branch
      %179 = sbr.rel (0) target = $region53
    $region52: #{tpu_custom_call.1} parent=1 // pred_region
      %181 = dma.done [#allocation11], 16
    $region53: #{tpu_custom_call.1} parent=1 // pred_fallthru
      _
    %182 = vsyncpa [#allocation4], 1
    %183 = vsyncpa [#allocation7], 1
    %184 = vsyncpa [#allocation5], 1
    %185 = vsyncpa [#allocation11], 1

</llo_original>
